<compile_context>
chip_gen: v5e
topology: v5e:2x2
jax: 0.10.0
libtpu: 0.0.40
codegen_flags: <defaults>
</compile_context>

<pallas_src>
import jax
import jax.numpy as jnp
from jax.experimental import pallas as pl
from jax.experimental.pallas import tpu as pltpu


def _round_up(x: int, m: int) -> int:
    return (x + m - 1) // m * m


def _make_focal_loss_kernel(gamma: float, alpha, ignore_index: int,
                            n_rows: int, tile_n: int, tiles_per_part: int):
    g = float(gamma)

    def kernel(logits_ref, tgt_ref, out_ref, loss_acc, cnt_acc):
        p = pl.program_id(0)          # parallel partition (megacore)
        i = pl.program_id(1)          # reduction over row tiles
        n_i = pl.num_programs(1)

        @pl.when(i == 0)
        def _init():
            loss_acc[...] = jnp.zeros_like(loss_acc)
            cnt_acc[...] = jnp.zeros_like(cnt_acc)

        x = logits_ref[...].astype(jnp.float32)      # (tile_n, C), f32 math
        tgt = tgt_ref[...]                           # (tile_n, 1) int32

        # Global row index of each row in this tile (unclamped, so fully-OOB
        # duplicate tiles from the clamped index_map contribute nothing).
        gi = p * tiles_per_part + i
        rows = gi * tile_n + jax.lax.broadcasted_iota(jnp.int32, (tile_n, 1), 0)
        valid = (rows < n_rows) & (tgt != ignore_index)   # (tile_n, 1) bool

        # Numerically stable softmax pieces: one full-width pass over (tile_n, C).
        m = jnp.max(x, axis=-1, keepdims=True)
        sh = x - m
        se = jnp.sum(jnp.exp(sh), axis=-1, keepdims=True)        # (tile_n, 1)

        # Single one-hot "gather" of the target class (VPU select + XLU reduce).
        col = jax.lax.broadcasted_iota(jnp.int32, x.shape, 1)
        onehot = col == tgt
        sh_t = jnp.sum(jnp.where(onehot, sh, 0.0), axis=-1, keepdims=True)

        logpt = sh_t - jnp.log(se)                   # log_softmax at target
        pt = jnp.exp(logpt)                          # softmax at target

        om = 1.0 - pt
        if g == 0.0:
            fac = jnp.ones_like(om)
        elif g == 1.0:
            fac = om
        elif g == 2.0:
            fac = om * om
        else:
            fac = jnp.exp(g * jnp.log(jnp.maximum(om, 1e-30)))
        focal = -fac * logpt                         # (tile_n, 1)

        if alpha is None:
            w = jnp.ones_like(focal)
        else:
            a = float(alpha)
            w = jnp.where(tgt > 0, 1.0 - a, a)

        # Select (not multiply) so NaN/Inf from garbage overhang rows never leaks.
        contrib = jnp.where(valid, focal * w, 0.0)
        cnt = jnp.where(valid, 1.0, 0.0)

        loss_acc[...] += jnp.sum(contrib, axis=0, keepdims=True)   # (1, 1)
        cnt_acc[...] += jnp.sum(cnt, axis=0, keepdims=True)        # (1, 1)

        # Single lane-dense store of the per-partition partials at the end.
        @pl.when(i == n_i - 1)
        def _finalize():
            sub = jax.lax.broadcasted_iota(jnp.int32, (1, 8, 128), 1)
            lane = jax.lax.broadcasted_iota(jnp.int32, (1, 8, 128), 2)
            out_ref[...] = jnp.where(
                (sub == 0) & (lane == 0), loss_acc[...],
                jnp.where((sub == 0) & (lane == 1), cnt_acc[...], 0.0))

    return kernel


def focal_loss(logits, targets, *, alpha=None, gamma=2.0, reduction="mean",
               ignore_index=-100):
    """Pallas TPU focal loss. logits: (N, C), targets: (N,) int."""
    if reduction not in ("mean", "sum"):
        # TODO(synk): reduction='none' has a data-dependent output shape
        # (ignored rows are dropped) and is not expressible statically.
        raise NotImplementedError(f"reduction={reduction!r} not supported")
    if alpha is not None and not isinstance(alpha, (int, float)):
        # TODO(synk): per-class alpha weights (Iterable) not implemented.
        raise NotImplementedError("only None / float alpha supported")

    N, C = logits.shape
    targets = targets.astype(jnp.int32)
    tgt2d = targets.reshape(N, 1)                    # tiny; no logits pad/copy

    # --- tile sizing: derived from C/dtype and a conservative VMEM budget ----
    itemsize = jnp.dtype(logits.dtype).itemsize
    bytes_per_row = max(C * itemsize, 1)
    target_block_bytes = 4 * 1024 * 1024             # per logits buffer
    tile_n = target_block_bytes // bytes_per_row
    tile_n = max(8, (tile_n // 8) * 8)                # multiple of 8 sublanes
    tile_n = min(tile_n, 8192)                        # per-step cap
    tile_n = min(tile_n, _round_up(N, 8))             # don't over-block small N

    num_tiles = pl.cdiv(N, tile_n)
    P = 2 if num_tiles >= 2 else 1                    # megacore sharding on v7x
    tiles_per_part = pl.cdiv(num_tiles, P)

    def row_map(p, i):
        # Clamp so the (possibly) fully-out-of-range last tile of the last
        # partition re-reads a real block; its rows are masked in-kernel.
        return (jnp.minimum(p * tiles_per_part + i, num_tiles - 1), 0)

    kernel = _make_focal_loss_kernel(gamma, alpha, ignore_index,
                                     N, tile_n, tiles_per_part)

    partials = pl.pallas_call(
        kernel,
        out_shape=jax.ShapeDtypeStruct((P, 8, 128), jnp.float32),
        grid=(P, tiles_per_part),
        in_specs=[
            pl.BlockSpec((tile_n, C), row_map),       # streamed logits tiles
            pl.BlockSpec((tile_n, 1), row_map),       # targets per row tile
        ],
        # One lane-dense accumulator block per parallel partition; it stays
        # VMEM-resident across the reduction axis and is stored once.
        out_specs=pl.BlockSpec((1, 8, 128), lambda p, i: (p, 0, 0)),
        scratch_shapes=[pltpu.VMEM((1, 1), jnp.float32),
                        pltpu.VMEM((1, 1), jnp.float32)],
        compiler_params=pltpu.CompilerParams(
            dimension_semantics=("parallel", "arbitrary"),
            vmem_limit_bytes=32 * 1024 * 1024),
    )(logits, tgt2d)

    loss_sum = jnp.sum(partials[:, 0, 0])
    valid_cnt = jnp.sum(partials[:, 0, 1])

    if reduction == "mean":
        # Note: an all-ignored batch yields 0/0 = NaN, matching torch.mean([]).
        return loss_sum / valid_cnt
    return loss_sum


def _reference_focal_loss(logits, targets, alpha=None, gamma=2.0,
                          reduction="mean", ignore_index=-100):
    mask = targets != ignore_index
    x = logits[mask]
    t = targets[mask]
    logpt_all = jax.nn.log_softmax(x, axis=-1)
    pt_all = jax.nn.softmax(x, axis=-1)
    idx = jnp.arange(x.shape[0])
    logpt = logpt_all[idx, t]
    pt = pt_all[idx, t]
    focal = -((1.0 - pt) ** gamma) * logpt
    if alpha is None:
        w = jnp.ones_like(focal)
    else:
        w = jnp.where(t > 0, 1.0 - alpha, alpha)
    tmp = focal * w
    if reduction == "mean":
        return jnp.mean(tmp)
    if reduction == "sum":
        return jnp.sum(tmp)
    return tmp


if __name__ == "__main__":
    key = jax.random.PRNGKey(0)
    k1, k2 = jax.random.split(key)

    N, C = 50, 5
    logits = jax.random.normal(k1, (N, C), dtype=jnp.float32)
    targets = jax.random.randint(k2, (N,), 0, C, dtype=jnp.int32)
    # a few ignored rows (ignore_index = -100, as in the PyTorch default)
    targets = targets.at[3].set(-100).at[17].set(-100)

    # Default FocalLoss(): alpha=None, gamma=2.0, reduction='mean'
    out = focal_loss(logits, targets)
    out = jax.block_until_ready(out)
    ref = _reference_focal_loss(logits, targets)
    assert jnp.allclose(out, ref, atol=1e-5, rtol=1e-5), f"mean mismatch {out} vs {ref}"

    # Float-alpha + 'sum' reduction path
    out2 = focal_loss(logits, targets, alpha=0.25, gamma=2.0, reduction="sum")
    out2 = jax.block_until_ready(out2)
    ref2 = _reference_focal_loss(logits, targets, alpha=0.25, gamma=2.0, reduction="sum")
    assert jnp.allclose(out2, ref2, atol=1e-4, rtol=1e-4), f"sum mismatch {out2} vs {ref2}"

    print("KERNEL_OK")
</pallas_src>

<mosaic_0001>
module attributes {stable_mosaic.version = 11 : i64} {
  func.func @kernel(%arg0: i32, %arg1: i32, %arg2: memref<56x5xf32, #tpu.memory_space<vmem>>, %arg3: memref<56x1xi32, #tpu.memory_space<vmem>>, %arg4: memref<1x8x128xf32, #tpu.memory_space<vmem>>, %arg5: memref<1x1xf32, #tpu.memory_space<vmem>>, %arg6: memref<1x1xf32, #tpu.memory_space<vmem>>) attributes {dimension_semantics = [#tpu.dimension_semantics<parallel>, #tpu.dimension_semantics<arbitrary>], iteration_bounds = array<i64: 1, 1>, scalar_prefetch = 0 : i64, scratch_operands = 2 : i64, tpu.core_type = #tpu.core_type<tc>, window_params = [{transform_indices = @transform_0, window_bounds = array<i64: 56, 5>}, {transform_indices = @transform_1, window_bounds = array<i64: 56, 1>}, {transform_indices = @transform_2, window_bounds = array<i64: 1, 8, 128>}]} {
    %c0_i32 = arith.constant 0 : i32
    %0 = arith.cmpi eq, %arg1, %c0_i32 : i32
    %1 = arith.extui %0 : i1 to i32
    %c0_i32_0 = arith.constant 0 : i32
    %2 = arith.cmpi ne, %1, %c0_i32_0 : i32
    scf.if %2 {
      %cst_25 = arith.constant 0.000000e+00 : f32
      %59 = vector.broadcast %cst_25 : f32 to vector<1x1xf32>
      %c0_26 = arith.constant 0 : index
      %c0_27 = arith.constant 0 : index
      %60 = vector.load %arg5[%c0_26, %c0_27] : memref<1x1xf32, #tpu.memory_space<vmem>>, vector<1x1xf32>
      tpu.vector_store %arg5[%c0_26, %c0_27], %59 {strides = array<i32>} : memref<1x1xf32, #tpu.memory_space<vmem>>, vector<1x1xf32>,
      %cst_28 = arith.constant 0.000000e+00 : f32
      %61 = vector.broadcast %cst_28 : f32 to vector<1x1xf32>
      %c0_29 = arith.constant 0 : index
      %c0_30 = arith.constant 0 : index
      %62 = vector.load %arg6[%c0_29, %c0_30] : memref<1x1xf32, #tpu.memory_space<vmem>>, vector<1x1xf32>
      tpu.vector_store %arg6[%c0_29, %c0_30], %61 {strides = array<i32>} : memref<1x1xf32, #tpu.memory_space<vmem>>, vector<1x1xf32>,
    } else {
    }
    %c0 = arith.constant 0 : index
    %c0_1 = arith.constant 0 : index
    %3 = vector.load %arg2[%c0, %c0_1] : memref<56x5xf32, #tpu.memory_space<vmem>>, vector<56x5xf32>
    %c0_2 = arith.constant 0 : index
    %c0_3 = arith.constant 0 : index
    %4 = vector.load %arg3[%c0_2, %c0_3] : memref<56x1xi32, #tpu.memory_space<vmem>>, vector<56x1xi32>
    %c1_i32 = arith.constant 1 : i32
    %5 = arith.muli %arg0, %c1_i32 : i32
    %6 = arith.addi %5, %arg1 : i32
    %c56_i32 = arith.constant 56 : i32
    %7 = arith.muli %6, %c56_i32 : i32
    %8 = tpu.iota {dimensions = array<i32: 0>} : vector<56x1xi32>
    %9 = vector.broadcast %7 : i32 to vector<56x1xi32>
    %10 = arith.addi %9, %8 : vector<56x1xi32>
    %c50_i32 = arith.constant 50 : i32
    %11 = vector.broadcast %c50_i32 : i32 to vector<56x1xi32>
    %12 = arith.cmpi slt, %10, %11 : vector<56x1xi32>
    %c-100_i32 = arith.constant -100 : i32
    %13 = vector.broadcast %c-100_i32 : i32 to vector<56x1xi32>
    %14 = arith.cmpi ne, %4, %13 : vector<56x1xi32>
    %15 = arith.andi %12, %14 : vector<56x1xi1>
    %cst = arith.constant dense<0xFF800000> : vector<56xf32>
    %16 = vector.multi_reduction <maximumf>, %3, %cst [1] : vector<56x5xf32> to vector<56xf32>
    %17 = vector.shape_cast %16 : vector<56xf32> to vector<56x1xf32>
    %18 = vector.broadcast %17 : vector<56x1xf32> to vector<56x5xf32>
    %19 = arith.subf %3, %18 : vector<56x5xf32>
    %20 = math.exp %19 : vector<56x5xf32>
    %cst_4 = arith.constant dense<0.000000e+00> : vector<56xf32>
    %21 = vector.multi_reduction <add>, %20, %cst_4 [1] : vector<56x5xf32> to vector<56xf32>
    %22 = vector.shape_cast %21 : vector<56xf32> to vector<56x1xf32>
    %23 = tpu.iota {dimensions = array<i32: 1>} : vector<56x5xi32>
    %24 = vector.broadcast %4 : vector<56x1xi32> to vector<56x5xi32>
    %25 = arith.cmpi eq, %23, %24 : vector<56x5xi32>
    %cst_5 = arith.constant 0.000000e+00 : f32
    %26 = vector.broadcast %cst_5 : f32 to vector<56x5xf32>
    %27 = arith.select %25, %19, %26 : vector<56x5xi1>, vector<56x5xf32>
    %cst_6 = arith.constant dense<0.000000e+00> : vector<56xf32>
    %28 = vector.multi_reduction <add>, %27, %cst_6 [1] : vector<56x5xf32> to vector<56xf32>
    %29 = vector.shape_cast %28 : vector<56xf32> to vector<56x1xf32>
    %30 = math.log %22 : vector<56x1xf32>
    %31 = arith.subf %29, %30 : vector<56x1xf32>
    %32 = math.exp %31 : vector<56x1xf32>
    %cst_7 = arith.constant 1.000000e+00 : f32
    %33 = vector.broadcast %cst_7 : f32 to vector<56x1xf32>
    %34 = arith.subf %33, %32 : vector<56x1xf32>
    %35 = arith.mulf %34, %34 : vector<56x1xf32>
    %cst_8 = arith.constant 0.000000e+00 : f32
    %36 = vector.broadcast %cst_8 : f32 to vector<56x1xf32>
    %37 = arith.subf %36, %35 : vector<56x1xf32>
    %38 = arith.mulf %37, %31 : vector<56x1xf32>
    %cst_9 = arith.constant 1.000000e+00 : f32
    %39 = vector.broadcast %cst_9 : f32 to vector<56x1xf32>
    %40 = arith.mulf %38, %39 : vector<56x1xf32>
    %cst_10 = arith.constant 0.000000e+00 : f32
    %41 = vector.broadcast %cst_10 : f32 to vector<56x1xf32>
    %42 = arith.select %15, %40, %41 : vector<56x1xi1>, vector<56x1xf32>
    %cst_11 = arith.constant 1.000000e+00 : f32
    %cst_12 = arith.constant 0.000000e+00 : f32
    %43 = vector.broadcast %cst_11 : f32 to vector<56x1xf32>
    %44 = vector.broadcast %cst_12 : f32 to vector<56x1xf32>
    %45 = arith.select %15, %43, %44 : vector<56x1xi1>, vector<56x1xf32>
    %c0_13 = arith.constant 0 : index
    %c0_14 = arith.constant 0 : index
    %46 = vector.load %arg5[%c0_13, %c0_14] : memref<1x1xf32, #tpu.memory_space<vmem>>, vector<1x1xf32>
    %cst_15 = arith.constant dense<0.000000e+00> : vector<1xf32>
    %47 = vector.multi_reduction <add>, %42, %cst_15 [0] : vector<56x1xf32> to vector<1xf32>
    %48 = vector.shape_cast %47 : vector<1xf32> to vector<1x1xf32>
    %49 = arith.addf %46, %48 : vector<1x1xf32>
    %c0_16 = arith.constant 0 : index
    %c0_17 = arith.constant 0 : index
    %50 = vector.load %arg5[%c0_16, %c0_17] : memref<1x1xf32, #tpu.memory_space<vmem>>, vector<1x1xf32>
    tpu.vector_store %arg5[%c0_16, %c0_17], %49 {strides = array<i32>} : memref<1x1xf32, #tpu.memory_space<vmem>>, vector<1x1xf32>,
    %c0_18 = arith.constant 0 : index
    %c0_19 = arith.constant 0 : index
    %51 = vector.load %arg6[%c0_18, %c0_19] : memref<1x1xf32, #tpu.memory_space<vmem>>, vector<1x1xf32>
    %cst_20 = arith.constant dense<0.000000e+00> : vector<1xf32>
    %52 = vector.multi_reduction <add>, %45, %cst_20 [0] : vector<56x1xf32> to vector<1xf32>
    %53 = vector.shape_cast %52 : vector<1xf32> to vector<1x1xf32>
    %54 = arith.addf %51, %53 : vector<1x1xf32>
    %c0_21 = arith.constant 0 : index
    %c0_22 = arith.constant 0 : index
    %55 = vector.load %arg6[%c0_21, %c0_22] : memref<1x1xf32, #tpu.memory_space<vmem>>, vector<1x1xf32>
    tpu.vector_store %arg6[%c0_21, %c0_22], %54 {strides = array<i32>} : memref<1x1xf32, #tpu.memory_space<vmem>>, vector<1x1xf32>,
    %c0_i32_23 = arith.constant 0 : i32
    %56 = arith.cmpi eq, %arg1, %c0_i32_23 : i32
    %57 = arith.extui %56 : i1 to i32
    %c0_i32_24 = arith.constant 0 : i32
    %58 = arith.cmpi ne, %57, %c0_i32_24 : i32
    scf.if %58 {
      %59 = tpu.iota {dimensions = array<i32: 1>} : vector<1x8x128xi32>
      %60 = tpu.iota {dimensions = array<i32: 2>} : vector<1x8x128xi32>
      %c0_i32_25 = arith.constant 0 : i32
      %61 = vector.broadcast %c0_i32_25 : i32 to vector<1x8x128xi32>
      %62 = arith.cmpi eq, %59, %61 : vector<1x8x128xi32>
      %c0_i32_26 = arith.constant 0 : i32
      %63 = vector.broadcast %c0_i32_26 : i32 to vector<1x8x128xi32>
      %64 = arith.cmpi eq, %60, %63 : vector<1x8x128xi32>
      %65 = arith.andi %62, %64 : vector<1x8x128xi1>
      %c0_27 = arith.constant 0 : index
      %c0_28 = arith.constant 0 : index
      %66 = vector.load %arg5[%c0_27, %c0_28] : memref<1x1xf32, #tpu.memory_space<vmem>>, vector<1x1xf32>
      %c0_i32_29 = arith.constant 0 : i32
      %67 = vector.broadcast %c0_i32_29 : i32 to vector<1x8x128xi32>
      %68 = arith.cmpi eq, %59, %67 : vector<1x8x128xi32>
      %c1_i32_30 = arith.constant 1 : i32
      %69 = vector.broadcast %c1_i32_30 : i32 to vector<1x8x128xi32>
      %70 = arith.cmpi eq, %60, %69 : vector<1x8x128xi32>
      %71 = arith.andi %68, %70 : vector<1x8x128xi1>
      %c0_31 = arith.constant 0 : index
      %c0_32 = arith.constant 0 : index
      %72 = vector.load %arg6[%c0_31, %c0_32] : memref<1x1xf32, #tpu.memory_space<vmem>>, vector<1x1xf32>
      %cst_33 = arith.constant 0.000000e+00 : f32
      %73 = vector.shape_cast %72 : vector<1x1xf32> to vector<1x1x1xf32>
      %74 = vector.broadcast %73 : vector<1x1x1xf32> to vector<1x8x128xf32>
      %75 = vector.broadcast %cst_33 : f32 to vector<1x8x128xf32>
      %76 = arith.select %71, %74, %75 : vector<1x8x128xi1>, vector<1x8x128xf32>
      %77 = vector.shape_cast %66 : vector<1x1xf32> to vector<1x1x1xf32>
      %78 = vector.broadcast %77 : vector<1x1x1xf32> to vector<1x8x128xf32>
      %79 = arith.select %65, %78, %76 : vector<1x8x128xi1>, vector<1x8x128xf32>
      %c0_34 = arith.constant 0 : index
      %c0_35 = arith.constant 0 : index
      %c0_36 = arith.constant 0 : index
      %80 = vector.load %arg4[%c0_34, %c0_35, %c0_36] : memref<1x8x128xf32, #tpu.memory_space<vmem>>, vector<1x8x128xf32>
      tpu.vector_store %arg4[%c0_34, %c0_35, %c0_36], %79 {strides = array<i32>} : memref<1x8x128xf32, #tpu.memory_space<vmem>>, vector<1x8x128xf32>,
    } else {
    }
    return
  }
  func.func @transform_0(%arg0: i32, %arg1: i32) -> (i32, i32) {
    %c1_i32 = arith.constant 1 : i32
    %0 = arith.muli %arg0, %c1_i32 : i32
    %1 = arith.addi %0, %arg1 : i32
    %c0_i32 = arith.constant 0 : i32
    %2 = arith.minsi %1, %c0_i32 : i32
    %c0_i32_0 = arith.constant 0 : i32
    %c0_i32_1 = arith.constant 0 : i32
    return %2, %c0_i32_0 : i32, i32
  }
  func.func @transform_1(%arg0: i32, %arg1: i32) -> (i32, i32) {
    %c1_i32 = arith.constant 1 : i32
    %0 = arith.muli %arg0, %c1_i32 : i32
    %1 = arith.addi %0, %arg1 : i32
    %c0_i32 = arith.constant 0 : i32
    %2 = arith.minsi %1, %c0_i32 : i32
    %c0_i32_0 = arith.constant 0 : i32
    %c0_i32_1 = arith.constant 0 : i32
    return %2, %c0_i32_0 : i32, i32
  }
  func.func @transform_2(%arg0: i32, %arg1: i32) -> (i32, i32, i32) {
    %c0_i32 = arith.constant 0 : i32
    %c0_i32_0 = arith.constant 0 : i32
    %c0_i32_1 = arith.constant 0 : i32
    return %arg0, %c0_i32, %c0_i32_0 : i32, i32, i32
  }
}

</mosaic_0001>

<llo_original>
// kernel: tpu_custom_call.1
$region0: #{tpu_custom_call.1}
  #allocation0 [shape = 'u32[]', space=smem, size = 0x4, offset = 0x4, fixed_abs, tag = 'smem constant byte address 0x4 - core index']
  #allocation1 [shape = 'u32[72,128]{1,0:T(1,128)}', space=vmem, size = 0x9000, scoped, tag = 'internal scratch']
  #allocation2 [shape = 'f32[1,1]{1,0:T(1,128)}', space=vmem, size = 0x200, scoped, tag = 'scratch operand']
  #allocation3 [shape = 'f32[1,1]{1,0:T(1,128)}', space=vmem, size = 0x200, scoped, tag = 'scratch operand']
  %s0 = inlined_call_operand.vmem [shape: f32[50,5], index: 0, kind: input, shape index: {}]
  %s1 = inlined_call_operand.vmem [shape: s32[50,1], index: 1, kind: input, shape index: {}]
  %s2 = inlined_call_operand.hbm [shape: f32[1,8,128], index: 2, kind: output, shape index: {}]
  %s3 = sld [smem:[#allocation0]]
  $region26: #{tpu_custom_call.1} parent=0
    _
  %s5 = ssub.s32 1, %s3
  %s6 = scalar_select 0, %s5, %s3
  $region1: #{tpu_custom_call.1} parent=0
    #allocation4 [shape = 'u8[4096]{0}', space=vmem, size = 0x1000, scoped, tag = 'output window, operand 0, single buffered']
    #allocation5 [shape = 's32[1]{0}', space=sflag, size = 0x4, scoped, tag = 'scoped memory for tpu_custom_call.1']
    %7 = vsyncpa [#allocation5], 0
    // Predicated region
    $region2: #{tpu_custom_call.1} parent=1 // pred_check
      _
    $region3: #{tpu_custom_call.1} parent=1 // pred_check_branch
      %9 = sbr.rel (0) target = $region5
    $region4: #{tpu_custom_call.1} parent=1 // pred_region
      %s10 = sadd.s32 0, 0
      %p11 = scmp.lt.s32.totalorder %s10, 0
      %s12 = scalar_select %p11, %s10, 0
      %s13 = smul.u32 7, %s12
      %p14 = scmp.lt.s32.totalorder %s13, 6
      %s15 = scalar_select %p14, %s13, 6
      %s16 = smul.addr %s15, 8
      %s17 = scalar_lea.vmem %s0, %s16
      %s18 = sadd.s32 0, 0
      %p19 = scmp.lt.s32.totalorder %s18, 0
      %s20 = scalar_select %p19, %s18, 0
      %s21 = smul.u32 7, %s20
    $region5: #{tpu_custom_call.1} parent=1 // pred_fallthru
      _
    // Predicated region
    $region6: #{tpu_custom_call.1} parent=1 // pred_check
      _
    $region7: #{tpu_custom_call.1} parent=1 // pred_check_branch
      %23 = sbr.rel (0) target = $region9
    $region8: #{tpu_custom_call.1} parent=1 // pred_region
      %s24 = sadd.s32 0, 0
      %p25 = scmp.lt.s32.totalorder %s24, 0
      %s26 = scalar_select %p25, %s24, 0
      %s27 = smul.u32 7, %s26
      %p28 = scmp.lt.s32.totalorder %s27, 6
      %s29 = scalar_select %p28, %s27, 6
      %s30 = smul.addr %s29, 8
      %s31 = scalar_lea.vmem %s1, %s30
      %s32 = sadd.s32 0, 0
      %p33 = scmp.lt.s32.totalorder %s32, 0
      %s34 = scalar_select %p33, %s32, 0
      %s35 = smul.u32 7, %s34
    $region9: #{tpu_custom_call.1} parent=1 // pred_fallthru
      _
    %s36 = sadd.s32 0, 0
    %p37 = scmp.lt.s32.totalorder %s36, 0
    %s38 = scalar_select %p37, %s36, 0
    %s39 = smul.u32 7, %s38
    %p40 = scmp.lt.s32.totalorder %s39, 6
    %s41 = scalar_select %p40, %s39, 6
    %s42 = smul.addr %s41, 8
    %s43 = scalar_lea.vmem %s0, %s42
    %s44 = sadd.s32 0, 0
    %p45 = scmp.lt.s32.totalorder %s44, 0
    %s46 = scalar_select %p45, %s44, 0
    %s47 = smul.u32 7, %s46
    %p48 = scmp.lt.s32.totalorder %s47, 6
    %s49 = scalar_select %p48, %s47, 6
    %s50 = smul.addr %s49, 8
    %s51 = scalar_lea.vmem %s1, %s50
    %s52 = sadd.s32 0, 0
    %p53 = scmp.lt.s32.totalorder %s52, 0
    %s54 = scalar_select %p53, %s52, 0
    %s55 = smul.u32 7, %s54
    %p56 = scmp.lt.s32.totalorder %s55, 6
    %s57 = scalar_select %p56, %s55, 6
    %s58 = smul.addr %s57, 8
    %s59 = scalar_lea.vmem %s0, %s58
    %s60 = sadd.s32 0, 0
    %p61 = scmp.lt.s32.totalorder %s60, 0
    %s62 = scalar_select %p61, %s60, 0
    %s63 = smul.u32 7, %s62
    %s64 = sadd.s32 0, 0
    %p65 = scmp.lt.s32.totalorder %s64, 0
    %s66 = scalar_select %p65, %s64, 0
    %s67 = smul.u32 7, %s66
    %p68 = scmp.lt.s32.totalorder %s67, 6
    %s69 = scalar_select %p68, %s67, 6
    %s70 = smul.addr %s69, 8
    %s71 = scalar_lea.vmem %s1, %s70
    %s72 = sadd.s32 0, 0
    %p73 = scmp.lt.s32.totalorder %s72, 0
    %s74 = scalar_select %p73, %s72, 0
    %s75 = smul.u32 7, %s74
    %p76 = scmp.eq.s32.totalorder 0, 0
    // Predicated region
    $region10: #{tpu_custom_call.1} parent=1 // pred_check
      %p77 = pneg %p76
    $region11: #{tpu_custom_call.1} parent=1 // pred_check_branch
      %79 = sbr.rel (%p77) target = $region13
    $region12: #{tpu_custom_call.1} parent=1 // pred_region
      %vm80 = vcmask 0
      %81 = vst.msk [vmem:[#allocation2] sm:$0x1] %vm80, 0.0
      %82 = vst.msk [vmem:[#allocation3] sm:$0x1] %vm80, 0.0
    $region13: #{tpu_custom_call.1} parent=1 // pred_fallthru
      _
    %v83 = vld [vmem:[%s59] sm:$0xff]
    %v84 = vld [vmem:[%s59 + $0x8] sm:$0xff]
    %v85 = vld [vmem:[%s59 + $0x10] sm:$0xff]
    %v86 = vld [vmem:[%s59 + $0x18] sm:$0xff]
    %v87 = vld [vmem:[%s59 + $0x20] sm:$0xff]
    %v88 = vld [vmem:[%s59 + $0x28] sm:$0xff]
    %v89 = vld [vmem:[%s59 + $0x30] sm:$0xff]
    %v90 = vld [vmem:[%s71] sm:$0xff]
    %v91 = vld [vmem:[%s71 + $0x8] sm:$0xff]
    %v92 = vld [vmem:[%s71 + $0x10] sm:$0xff]
    %v93 = vld [vmem:[%s71 + $0x18] sm:$0xff]
    %v94 = vld [vmem:[%s71 + $0x20] sm:$0xff]
    %v95 = vld [vmem:[%s71 + $0x28] sm:$0xff]
    %v96 = vld [vmem:[%s71 + $0x30] sm:$0xff]
    %s97 = sadd.s32 0, 0
    %s98 = smul.u32 %s97, 56
    %v99 = vlaneseq
    %v100 = vshrl.u32 %v99, 7
    %v101 = vadd.s32 %v100, 8
    %v102 = vadd.s32 %v100, 16
    %v103 = vadd.s32 %v100, 24
    %v104 = vadd.s32 %v100, 32
    %v105 = vadd.s32 %v100, 40
    %v106 = vadd.s32 %v100, 48
    %v107 = vstv %s98
    %v108 = vadd.s32 %v107, %v100
    %v109 = vadd.s32 %v107, %v101
    %v110 = vadd.s32 %v107, %v102
    %v111 = vadd.s32 %v107, %v103
    %v112 = vadd.s32 %v107, %v104
    %v113 = vadd.s32 %v107, %v105
    %v114 = vadd.s32 %v107, %v106
    %vm115 = vcmp.lt.s32.totalorder %v108, 50
    %vm116 = vcmp.lt.s32.totalorder %v109, 50
    %vm117 = vcmp.lt.s32.totalorder %v110, 50
    %vm118 = vcmp.lt.s32.totalorder %v111, 50
    %vm119 = vcmp.lt.s32.totalorder %v112, 50
    %vm120 = vcmp.lt.s32.totalorder %v113, 50
    %vm121 = vcmp.lt.s32.totalorder %v114, 50
    %vm122 = vcmp.ne.s32.totalorder %v90, 4294967196
    %vm123 = vcmp.ne.s32.totalorder %v91, 4294967196
    %vm124 = vcmp.ne.s32.totalorder %v92, 4294967196
    %vm125 = vcmp.ne.s32.totalorder %v93, 4294967196
    %vm126 = vcmp.ne.s32.totalorder %v94, 4294967196
    %vm127 = vcmp.ne.s32.totalorder %v95, 4294967196
    %vm128 = vcmp.ne.s32.totalorder %v96, 4294967196
    %vm129 = vmand %vm115, %vm122
    %vm130 = vmand %vm116, %vm123
    %vm131 = vmand %vm117, %vm124
    %vm132 = vmand %vm118, %vm125
    %vm133 = vmand %vm119, %vm126
    %vm134 = vmand %vm120, %vm127
    %vm135 = vmand %vm121, %vm128
    %vm136 = vcmask 39936
    %v137 = vsel %vm136, %v83, -inf
    %138 = vmax.xlane.f32.xlu0 %v137
    %v139 = vpop.xlane.xlu0 %138
    %v140 = vsel %vm136, %v84, -inf
    %141 = vmax.xlane.f32.xlu0 %v140
    %v142 = vpop.xlane.xlu0 %141
    %v143 = vsel %vm136, %v85, -inf
    %144 = vmax.xlane.f32.xlu0 %v143
    %v145 = vpop.xlane.xlu0 %144
    %v146 = vsel %vm136, %v86, -inf
    %147 = vmax.xlane.f32.xlu0 %v146
    %v148 = vpop.xlane.xlu0 %147
    %v149 = vsel %vm136, %v87, -inf
    %150 = vmax.xlane.f32.xlu0 %v149
    %v151 = vpop.xlane.xlu0 %150
    %v152 = vsel %vm136, %v88, -inf
    %153 = vmax.xlane.f32.xlu0 %v152
    %v154 = vpop.xlane.xlu0 %153
    %v155 = vsel %vm136, %v89, -inf
    %156 = vmax.xlane.f32.xlu0 %v155
    %v157 = vpop.xlane.xlu0 %156
    %v158 = vsub.f32 %v83, %v139
    %v159 = vsub.f32 %v84, %v142
    %v160 = vsub.f32 %v85, %v145
    %v161 = vsub.f32 %v86, %v148
    %v162 = vsub.f32 %v87, %v151
    %v163 = vsub.f32 %v88, %v154
    %v164 = vsub.f32 %v89, %v157
    %v165 = vmul.f32 %v158, 1.442695
    %v166 = vpow.pop %v165
    %v167 = vmul.f32 %v159, 1.442695
    %v168 = vpow.pop %v167
    %v169 = vmul.f32 %v160, 1.442695
    %v170 = vpow.pop %v169
    %v171 = vmul.f32 %v161, 1.442695
    %v172 = vpow.pop %v171
    %v173 = vmul.f32 %v162, 1.442695
    %v174 = vpow.pop %v173
    %v175 = vmul.f32 %v163, 1.442695
    %v176 = vpow.pop %v175
    %v177 = vmul.f32 %v164, 1.442695
    %v178 = vpow.pop %v177
    %v179 = vsel %vm136, %v166, 0.0
    %180 = vadd.xlane.f32.xlu0 %v179
    %v181 = vpop.xlane.xlu0 %180
    %v182 = vsel %vm136, %v168, 0.0
    %183 = vadd.xlane.f32.xlu0 %v182
    %v184 = vpop.xlane.xlu0 %183
    %v185 = vsel %vm136, %v170, 0.0
    %186 = vadd.xlane.f32.xlu0 %v185
    %v187 = vpop.xlane.xlu0 %186
    %v188 = vsel %vm136, %v172, 0.0
    %189 = vadd.xlane.f32.xlu0 %v188
    %v190 = vpop.xlane.xlu0 %189
    %v191 = vsel %vm136, %v174, 0.0
    %192 = vadd.xlane.f32.xlu0 %v191
    %v193 = vpop.xlane.xlu0 %192
    %v194 = vsel %vm136, %v176, 0.0
    %195 = vadd.xlane.f32.xlu0 %v194
    %v196 = vpop.xlane.xlu0 %195
    %v197 = vsel %vm136, %v178, 0.0
    %198 = vadd.xlane.f32.xlu0 %v197
    %v199 = vpop.xlane.xlu0 %198
    %v200 = vlaneseq
    %v201 = vand.u32 %v200, 127
    %202 = vset.pattern.permute.xlu0 0
    %203 = vperm.xlu0 %202, %v90
    %v204 = vpop.permute.xlu0 %203
    %205 = vset.pattern.permute.xlu0 0
    %206 = vperm.xlu0 %205, %v91
    %v207 = vpop.permute.xlu0 %206
    %208 = vset.pattern.permute.xlu0 0
    %209 = vperm.xlu0 %208, %v92
    %v210 = vpop.permute.xlu0 %209
    %211 = vset.pattern.permute.xlu0 0
    %212 = vperm.xlu0 %211, %v93
    %v213 = vpop.permute.xlu0 %212
    %214 = vset.pattern.permute.xlu0 0
    %215 = vperm.xlu0 %214, %v94
    %v216 = vpop.permute.xlu0 %215
    %217 = vset.pattern.permute.xlu0 0
    %218 = vperm.xlu0 %217, %v95
    %v219 = vpop.permute.xlu0 %218
    %220 = vset.pattern.permute.xlu0 0
    %221 = vperm.xlu0 %220, %v96
    %v222 = vpop.permute.xlu0 %221
    %vm223 = vcmp.eq.s32.totalorder %v201, %v204
    %vm224 = vcmp.eq.s32.totalorder %v201, %v207
    %vm225 = vcmp.eq.s32.totalorder %v201, %v210
    %vm226 = vcmp.eq.s32.totalorder %v201, %v213
    %vm227 = vcmp.eq.s32.totalorder %v201, %v216
    %vm228 = vcmp.eq.s32.totalorder %v201, %v219
    %vm229 = vcmp.eq.s32.totalorder %v201, %v222
    %v230 = vsel %vm223, %v158, 0.0
    %v231 = vsel %vm224, %v159, 0.0
    %v232 = vsel %vm225, %v160, 0.0
    %v233 = vsel %vm226, %v161, 0.0
    %v234 = vsel %vm227, %v162, 0.0
    %v235 = vsel %vm228, %v163, 0.0
    %v236 = vsel %vm229, %v164, 0.0
    %v237 = vsel %vm136, %v230, 0.0
    %238 = vadd.xlane.f32.xlu0 %v237
    %v239 = vpop.xlane.xlu0 %238
    %v240 = vsel %vm136, %v231, 0.0
    %241 = vadd.xlane.f32.xlu0 %v240
    %v242 = vpop.xlane.xlu0 %241
    %v243 = vsel %vm136, %v232, 0.0
    %244 = vadd.xlane.f32.xlu0 %v243
    %v245 = vpop.xlane.xlu0 %244
    %v246 = vsel %vm136, %v233, 0.0
    %247 = vadd.xlane.f32.xlu0 %v246
    %v248 = vpop.xlane.xlu0 %247
    %v249 = vsel %vm136, %v234, 0.0
    %250 = vadd.xlane.f32.xlu0 %v249
    %v251 = vpop.xlane.xlu0 %250
    %v252 = vsel %vm136, %v235, 0.0
    %253 = vadd.xlane.f32.xlu0 %v252
    %v254 = vpop.xlane.xlu0 %253
    %v255 = vsel %vm136, %v236, 0.0
    %256 = vadd.xlane.f32.xlu0 %v255
    %v257 = vpop.xlane.xlu0 %256
    %v258 = vlog2.pop %v181
    %v259 = vmul.f32 %v258, 0.6931472
    %v260 = vlog2.pop %v184
    %v261 = vmul.f32 %v260, 0.6931472
    %v262 = vlog2.pop %v187
    %v263 = vmul.f32 %v262, 0.6931472
    %v264 = vlog2.pop %v190
    %v265 = vmul.f32 %v264, 0.6931472
    %v266 = vlog2.pop %v193
    %v267 = vmul.f32 %v266, 0.6931472
    %v268 = vlog2.pop %v196
    %v269 = vmul.f32 %v268, 0.6931472
    %v270 = vlog2.pop %v199
    %v271 = vmul.f32 %v270, 0.6931472
    %v272 = vsub.f32 %v239, %v259
    %v273 = vsub.f32 %v242, %v261
    %v274 = vsub.f32 %v245, %v263
    %v275 = vsub.f32 %v248, %v265
    %v276 = vsub.f32 %v251, %v267
    %v277 = vsub.f32 %v254, %v269
    %v278 = vsub.f32 %v257, %v271
    %v279 = vmul.f32 %v272, 1.442695
    %v280 = vpow.pop %v279
    %v281 = vmul.f32 %v273, 1.442695
    %v282 = vpow.pop %v281
    %v283 = vmul.f32 %v274, 1.442695
    %v284 = vpow.pop %v283
    %v285 = vmul.f32 %v275, 1.442695
    %v286 = vpow.pop %v285
    %v287 = vmul.f32 %v276, 1.442695
    %v288 = vpow.pop %v287
    %v289 = vmul.f32 %v277, 1.442695
    %v290 = vpow.pop %v289
    %v291 = vmul.f32 %v278, 1.442695
    %v292 = vpow.pop %v291
    %v293 = vsub.f32 1.0, %v280
    %v294 = vsub.f32 1.0, %v282
    %v295 = vsub.f32 1.0, %v284
    %v296 = vsub.f32 1.0, %v286
    %v297 = vsub.f32 1.0, %v288
    %v298 = vsub.f32 1.0, %v290
    %v299 = vsub.f32 1.0, %v292
    %v300 = vmul.f32 %v293, %v293
    %v301 = vmul.f32 %v294, %v294
    %v302 = vmul.f32 %v295, %v295
    %v303 = vmul.f32 %v296, %v296
    %v304 = vmul.f32 %v297, %v297
    %v305 = vmul.f32 %v298, %v298
    %v306 = vmul.f32 %v299, %v299
    %v307 = vsub.f32 0.0, %v300
    %v308 = vsub.f32 0.0, %v301
    %v309 = vsub.f32 0.0, %v302
    %v310 = vsub.f32 0.0, %v303
    %v311 = vsub.f32 0.0, %v304
    %v312 = vsub.f32 0.0, %v305
    %v313 = vsub.f32 0.0, %v306
    %v314 = vmul.f32 %v307, %v272
    %v315 = vmul.f32 %v308, %v273
    %v316 = vmul.f32 %v309, %v274
    %v317 = vmul.f32 %v310, %v275
    %v318 = vmul.f32 %v311, %v276
    %v319 = vmul.f32 %v312, %v277
    %v320 = vmul.f32 %v313, %v278
    %v321 = vsel %vm129, %v314, 0.0
    %v322 = vsel %vm130, %v315, 0.0
    %v323 = vsel %vm131, %v316, 0.0
    %v324 = vsel %vm132, %v317, 0.0
    %v325 = vsel %vm133, %v318, 0.0
    %v326 = vsel %vm134, %v319, 0.0
    %v327 = vsel %vm135, %v320, 0.0
    %v328 = vsel %vm129, 1.0, 0.0
    %v329 = vsel %vm130, 1.0, 0.0
    %v330 = vsel %vm131, 1.0, 0.0
    %v331 = vsel %vm132, 1.0, 0.0
    %v332 = vsel %vm133, 1.0, 0.0
    %v333 = vsel %vm134, 1.0, 0.0
    %v334 = vsel %vm135, 1.0, 0.0
    %v335 = vld [vmem:[#allocation2] sm:$0x1]
    %vm336 = vcmask 7168
    %v337 = vsel %vm336, %v321, 0.0
    %v338 = vsel %vm336, %v322, 0.0
    %v339 = vadd.f32 %v337, %v338
    %v340 = vsel %vm336, %v323, 0.0
    %v341 = vadd.f32 %v339, %v340
    %v342 = vsel %vm336, %v324, 0.0
    %v343 = vadd.f32 %v341, %v342
    %v344 = vsel %vm336, %v325, 0.0
    %v345 = vadd.f32 %v343, %v344
    %v346 = vsel %vm336, %v326, 0.0
    %v347 = vadd.f32 %v345, %v346
    %v348 = vsel %vm336, %v327, 0.0
    %v349 = vadd.f32 %v347, %v348
    %v350 = vrot.slane %v349, 4
    %v351 = vadd.f32 %v349, %v350
    %v352 = vrot.slane %v351, 2
    %v353 = vadd.f32 %v351, %v352
    %v354 = vrot.slane %v353, 1
    %v355 = vadd.f32 %v353, %v354
    %v356 = vadd.f32 %v335, %v355
    %vm357 = vcmask 0
    %358 = vst.msk [vmem:[#allocation2] sm:$0x1] %vm357, %v356
    %v359 = vld [vmem:[#allocation3] sm:$0x1]
    %v360 = vsel %vm336, %v328, 0.0
    %v361 = vsel %vm336, %v329, 0.0
    %v362 = vadd.f32 %v360, %v361
    %v363 = vsel %vm336, %v330, 0.0
    %v364 = vadd.f32 %v362, %v363
    %v365 = vsel %vm336, %v331, 0.0
    %v366 = vadd.f32 %v364, %v365
    %v367 = vsel %vm336, %v332, 0.0
    %v368 = vadd.f32 %v366, %v367
    %v369 = vsel %vm336, %v333, 0.0
    %v370 = vadd.f32 %v368, %v369
    %v371 = vsel %vm336, %v334, 0.0
    %v372 = vadd.f32 %v370, %v371
    %v373 = vrot.slane %v372, 4
    %v374 = vadd.f32 %v372, %v373
    %v375 = vrot.slane %v374, 2
    %v376 = vadd.f32 %v374, %v375
    %v377 = vrot.slane %v376, 1
    %v378 = vadd.f32 %v376, %v377
    %v379 = vadd.f32 %v359, %v378
    %380 = vst.msk [vmem:[#allocation3] sm:$0x1] %vm357, %v379
    // Predicated region
    $region14: #{tpu_custom_call.1} parent=1 // pred_check
      %p381 = pneg %p76
    $region15: #{tpu_custom_call.1} parent=1 // pred_check_branch
      %383 = sbr.rel (%p381) target = $region17
    $region16: #{tpu_custom_call.1} parent=1 // pred_region
      %vm384 = vcmp.eq.s32.totalorder %v100, 0
      %vm385 = vcmp.eq.s32.totalorder %v201, 0
      %vm386 = vmand %vm384, %vm385
      %v387 = vld [vmem:[#allocation2] sm:$0x1]
      %vm388 = vcmp.eq.s32.totalorder %v201, 1
      %vm389 = vmand %vm384, %vm388
      %v390 = vld [vmem:[#allocation3] sm:$0x1]
      %v392 = vperm.slane %v390, 0
      %393 = vset.pattern.permute.xlu0 0
      %394 = vperm.xlu0 %393, %v392
      %v395 = vpop.permute.xlu0 %394
      %v397 = vsel %vm389, %v395, 0.0
      %v399 = vperm.slane %v387, 0
      %400 = vset.pattern.permute.xlu0 0
      %401 = vperm.xlu0 %400, %v399
      %v402 = vpop.permute.xlu0 %401
      %v404 = vsel %vm386, %v402, %v397
      %405 = vst [vmem:[#allocation4] sm:$0xff] %v404
    $region17: #{tpu_custom_call.1} parent=1 // pred_fallthru
      _
    // Predicated region
    $region18: #{tpu_custom_call.1} parent=1 // pred_check
      _
    $region19: #{tpu_custom_call.1} parent=1 // pred_check_branch
      %407 = sbr.rel (0) target = $region21
    $region20: #{tpu_custom_call.1} parent=1 // pred_region
      %409 = vsyncadd [#allocation5], 0
      %s411 = sshll.u32 [#allocation4], 4
      %s412 = int_to_ptr.vmem [resolvable:$true] %s411
      %s413 = sshll.u32 %s2, 4
      %s414 = int_to_ptr.hbm [resolvable:$true] %s413
      %416 = dma.vmem_to_hbm [thread:$0]  %s412, 128, %s414, [#allocation5]
    $region21: #{tpu_custom_call.1} parent=1 // pred_fallthru
      _
    // Predicated region
    $region22: #{tpu_custom_call.1} parent=1 // pred_check
      _
    $region23: #{tpu_custom_call.1} parent=1 // pred_check_branch
      %418 = sbr.rel (0) target = $region25
    $region24: #{tpu_custom_call.1} parent=1 // pred_region
      %420 = dma.done [#allocation5], 128
    $region25: #{tpu_custom_call.1} parent=1 // pred_fallthru
      _
    %421 = vsyncpa [#allocation5], 1

</llo_original>
